<compile_context>
chip_gen: v7x
topology: tpu7x:2x2x1
jax: 0.10.0
libtpu: 0.0.40
codegen_flags: <defaults>
</compile_context>

<pallas_src>
import numpy as np

import jax
import jax.numpy as jnp
from jax.experimental import pallas as pl
from jax.experimental.pallas import tpu as pltpu


# ----------------------------------------------------------------------------
# Kernel body: fused Linear1 -> ReLU -> Linear2 for one tile of patch rows.
# ----------------------------------------------------------------------------
def _sw_patch_mlp_kernel(win_ref, w1_ref, b1_ref, w2_ref, b2_ref, out_ref):
    # win_ref: (tile_p, patch_dim)  bf16   -- per-tile sliding windows
    # w1_ref : (patch_dim, d_model) bf16   -- VMEM-resident for the whole grid
    # b1_ref : (1, d_model)         f32
    # w2_ref : (d_model, d_model)   bf16   -- VMEM-resident for the whole grid
    # b2_ref : (1, d_model)         f32
    # out_ref: (tile_p, d_model)

    # Linear1: one MXU dot at full contraction depth K = patch_dim.
    acc = jnp.dot(win_ref[...], w1_ref[...], preferred_element_type=jnp.float32)

    # Bias + ReLU in f32 on the accumulator (VPU).
    h = jnp.maximum(acc + b1_ref[...], 0.0)

    # Linear2: hidden activation never leaves on-chip memory.
    out = jnp.dot(h.astype(w2_ref.dtype), w2_ref[...],
                  preferred_element_type=jnp.float32)
    out_ref[...] = (out + b2_ref[...]).astype(out_ref.dtype)


# ----------------------------------------------------------------------------
# Wrapper
# ----------------------------------------------------------------------------
def sw_patch_encoder(x, w1, b1, w2, b2, *, patch_len, stride, pad=True,
                     tile_p_cap=256, matmul_dtype=jnp.bfloat16):
    """Forward pass of SWPatchEncoder.

    x : (*leading, C, T)
    w1: (patch_dim, d_model)   (= torch Linear1.weight.T)
    b1: (d_model,)
    w2: (d_model, d_model)     (= torch Linear2.weight.T)
    b2: (d_model,)
    returns (*leading, P, d_model) in x.dtype
    """
    assert x.ndim >= 3, "expected (batch, ..., channel, time)"
    assert tile_p_cap % 8 == 0, "tile_p_cap must be a multiple of 8 (sublane tiling)"
    *lead, C, T = x.shape
    B = int(np.prod(lead))
    patch_dim = patch_len * C
    assert w1.shape[0] == patch_dim, (w1.shape, patch_dim)
    d_model = w1.shape[1]
    assert w2.shape == (d_model, d_model)
    # NOTE: d_model should be a multiple of 128 for lane-dense stores (128 here).

    L0 = C * T
    L = L0 + (stride if pad else 0)
    assert L >= patch_dim, "input too short for one patch"
    P = (L - patch_dim) // stride + 1

    # --- unfold + ReplicationPad1d as one clamped gather (no HBM pad copy) ---
    # Positions >= L0 replicate the last element, exactly ReplicationPad1d((0, stride)).
    xf = x.reshape(B, L0)
    idx = jnp.arange(P)[:, None] * stride + jnp.arange(patch_dim)[None, :]
    idx = jnp.minimum(idx, L0 - 1)
    windows = jnp.take(xf, idx, axis=1).astype(matmul_dtype)    # (B, P, patch_dim)

    w1m = w1.astype(matmul_dtype)
    w2m = w2.astype(matmul_dtype)
    b1_2d = b1.reshape(1, d_model).astype(jnp.float32)
    b2_2d = b2.reshape(1, d_model).astype(jnp.float32)

    # --- tiling: rows of patches per grid step ---
    tile_p = P if P <= tile_p_cap else tile_p_cap
    p_tiles = pl.cdiv(P, tile_p)

    # --- VMEM budget (with (8,128) layout padding), capped for v7x headroom ---
    def _rup(n, m):
        return ((n + m - 1) // m) * m

    mm_sz = jnp.dtype(matmul_dtype).itemsize
    out_sz = jnp.dtype(x.dtype).itemsize
    in_tile = _rup(tile_p, 8) * _rup(patch_dim, 128) * mm_sz
    out_tile = _rup(tile_p, 8) * _rup(d_model, 128) * out_sz
    w_bytes = (_rup(patch_dim, 8) + _rup(d_model, 8)) * _rup(d_model, 128) * mm_sz
    bias_bytes = 2 * 8 * _rup(d_model, 128) * 4
    live_bytes = 2 * _rup(tile_p, 8) * _rup(d_model, 128) * 4     # f32 acc + h
    est = 2 * in_tile + 2 * out_tile + 2 * w_bytes + bias_bytes + live_bytes
    vmem_limit = int(min(max(2 * est + (4 << 20), 16 << 20), 48 << 20))

    flops = 2 * B * P * (patch_dim + d_model) * d_model
    bytes_accessed = (B * P * patch_dim * mm_sz
                      + (patch_dim * d_model + d_model * d_model) * mm_sz
                      + 2 * d_model * 4
                      + B * P * d_model * out_sz)

    out = pl.pallas_call(
        _sw_patch_mlp_kernel,
        out_shape=jax.ShapeDtypeStruct((B, P, d_model), x.dtype),
        grid_spec=pltpu.PrefetchScalarGridSpec(
            num_scalar_prefetch=0,
            grid=(B, p_tiles),
            in_specs=[
                # Per-tile window slab: O(tile_p) footprint, bounded in seq length.
                pl.BlockSpec((None, tile_p, patch_dim), lambda b, j: (b, j, 0)),
                # Weights / biases: constant index_map -> loaded once, VMEM-resident.
                pl.BlockSpec((patch_dim, d_model), lambda b, j: (0, 0)),
                pl.BlockSpec((1, d_model), lambda b, j: (0, 0)),
                pl.BlockSpec((d_model, d_model), lambda b, j: (0, 0)),
                pl.BlockSpec((1, d_model), lambda b, j: (0, 0)),
            ],
            # Lane-dense output: last dim d_model (multiple of 128).
            out_specs=pl.BlockSpec((None, tile_p, d_model), lambda b, j: (b, j, 0)),
        ),
        compiler_params=pltpu.CompilerParams(
            dimension_semantics=("parallel", "parallel"),
            vmem_limit_bytes=vmem_limit,
        ),
        cost_estimate=pl.CostEstimate(
            flops=flops, transcendentals=0, bytes_accessed=bytes_accessed),
    )(windows, w1m, b1_2d, w2m, b2_2d)

    return out.reshape(*lead, P, d_model)


# ----------------------------------------------------------------------------
# Pure-JAX f32 reference (mirrors the PyTorch module exactly).
# ----------------------------------------------------------------------------
def sw_patch_encoder_reference(x, w1, b1, w2, b2, *, patch_len, stride, pad=True):
    *lead, C, T = x.shape
    patch_dim = patch_len * C
    xf = x.reshape(*lead, C * T)
    if pad:
        xf = jnp.pad(xf, [(0, 0)] * (xf.ndim - 1) + [(0, stride)], mode="edge")
    L = xf.shape[-1]
    P = (L - patch_dim) // stride + 1
    idx = jnp.arange(P)[:, None] * stride + jnp.arange(patch_dim)[None, :]
    windows = xf[..., idx]                                   # (..., P, patch_dim)
    h = jnp.maximum(windows @ w1 + b1, 0.0)
    return h @ w2 + b2


if __name__ == "__main__":
    key = jax.random.PRNGKey(0)
    k1, k2, k3, k4, k5 = jax.random.split(key, 5)

    # Small shapes consistent with the module defaults.
    B, C, T = 2, 2, 32
    patch_len, stride, d_model = 16, 8, 128
    patch_dim = patch_len * C                                # 32

    x = jax.random.normal(k1, (B, C, T), dtype=jnp.float32)
    # Weights stored as (in_features, out_features) == torch weight transposed.
    w1 = jax.random.normal(k2, (patch_dim, d_model), dtype=jnp.float32) * 0.05
    b1 = jax.random.normal(k3, (d_model,), dtype=jnp.float32) * 0.05
    w2 = jax.random.normal(k4, (d_model, d_model), dtype=jnp.float32) * 0.05
    b2 = jax.random.normal(k5, (d_model,), dtype=jnp.float32) * 0.05

    out = sw_patch_encoder(x, w1, b1, w2, b2,
                           patch_len=patch_len, stride=stride, pad=True)
    out = jax.block_until_ready(out)

    ref = sw_patch_encoder_reference(x, w1, b1, w2, b2,
                                     patch_len=patch_len, stride=stride, pad=True)
    # bf16 matmuls (f32 accumulation) vs f32 reference -> loosened tolerance.
    np.testing.assert_allclose(np.asarray(out), np.asarray(ref),
                               rtol=3e-2, atol=3e-2)
    print("KERNEL_OK")
</pallas_src>

<mosaic_0001>
module attributes {stable_mosaic.version = 11 : i64} {
  func.func @_sw_patch_mlp_kernel(%arg0: i32, %arg1: i32, %arg2: memref<1x6x32xbf16, #tpu.memory_space<vmem>>, %arg3: memref<32x128xbf16, #tpu.memory_space<vmem>>, %arg4: memref<1x128xf32, #tpu.memory_space<vmem>>, %arg5: memref<128x128xbf16, #tpu.memory_space<vmem>>, %arg6: memref<1x128xf32, #tpu.memory_space<vmem>>, %arg7: memref<1x6x128xf32, #tpu.memory_space<vmem>>) attributes {dimension_semantics = [#tpu.dimension_semantics<parallel>, #tpu.dimension_semantics<parallel>], iteration_bounds = array<i64: 2, 1>, scalar_prefetch = 0 : i64, scratch_operands = 0 : i64, tpu.core_type = #tpu.core_type<tc>, window_params = [{transform_indices = @transform_0, window_bounds = array<i64: 1, 6, 32>}, {pipeline_mode = #tpu.pipeline_mode<synchronous>, transform_indices = @transform_1, window_bounds = array<i64: 32, 128>}, {pipeline_mode = #tpu.pipeline_mode<synchronous>, transform_indices = @transform_2, window_bounds = array<i64: 1, 128>}, {pipeline_mode = #tpu.pipeline_mode<synchronous>, transform_indices = @transform_3, window_bounds = array<i64: 128, 128>}, {pipeline_mode = #tpu.pipeline_mode<synchronous>, transform_indices = @transform_4, window_bounds = array<i64: 1, 128>}, {transform_indices = @transform_5, window_bounds = array<i64: 1, 6, 128>}]} {
    %c0 = arith.constant 0 : index
    %c0_0 = arith.constant 0 : index
    %c0_1 = arith.constant 0 : index
    %0 = vector.load %arg2[%c0, %c0_0, %c0_1] : memref<1x6x32xbf16, #tpu.memory_space<vmem>>, vector<1x6x32xbf16>
    %1 = vector.shape_cast %0 : vector<1x6x32xbf16> to vector<6x32xbf16>
    %c0_2 = arith.constant 0 : index
    %c0_3 = arith.constant 0 : index
    %2 = vector.load %arg3[%c0_2, %c0_3] : memref<32x128xbf16, #tpu.memory_space<vmem>>, vector<32x128xbf16>
    %cst = arith.constant dense<0.000000e+00> : vector<6x128xf32>
    %3 = tpu.matmul %1, %2, %cst {dimension_numbers = #tpu.dot_dimension_numbers<[1], [0], [0], [1], [0, 0, 1, 1], [], []>} : vector<6x32xbf16>, vector<32x128xbf16>, vector<6x128xf32> -> vector<6x128xf32>
    %c0_4 = arith.constant 0 : index
    %c0_5 = arith.constant 0 : index
    %4 = vector.load %arg4[%c0_4, %c0_5] : memref<1x128xf32, #tpu.memory_space<vmem>>, vector<1x128xf32>
    %5 = vector.broadcast %4 : vector<1x128xf32> to vector<6x128xf32>
    %6 = arith.addf %3, %5 : vector<6x128xf32>
    %cst_6 = arith.constant 0.000000e+00 : f32
    %7 = vector.broadcast %cst_6 : f32 to vector<6x128xf32>
    %8 = arith.maximumf %6, %7 : vector<6x128xf32>
    %9 = arith.truncf %8 : vector<6x128xf32> to vector<6x128xbf16>
    %c0_7 = arith.constant 0 : index
    %c0_8 = arith.constant 0 : index
    %10 = vector.load %arg5[%c0_7, %c0_8] : memref<128x128xbf16, #tpu.memory_space<vmem>>, vector<128x128xbf16>
    %cst_9 = arith.constant dense<0.000000e+00> : vector<6x128xf32>
    %11 = tpu.matmul %9, %10, %cst_9 {dimension_numbers = #tpu.dot_dimension_numbers<[1], [0], [0], [1], [0, 0, 1, 1], [], []>} : vector<6x128xbf16>, vector<128x128xbf16>, vector<6x128xf32> -> vector<6x128xf32>
    %c0_10 = arith.constant 0 : index
    %c0_11 = arith.constant 0 : index
    %12 = vector.load %arg6[%c0_10, %c0_11] : memref<1x128xf32, #tpu.memory_space<vmem>>, vector<1x128xf32>
    %13 = vector.broadcast %12 : vector<1x128xf32> to vector<6x128xf32>
    %14 = arith.addf %11, %13 : vector<6x128xf32>
    %c0_12 = arith.constant 0 : index
    %c0_13 = arith.constant 0 : index
    %c0_14 = arith.constant 0 : index
    %15 = vector.load %arg7[%c0_12, %c0_13, %c0_14] : memref<1x6x128xf32, #tpu.memory_space<vmem>>, vector<1x6x128xf32>
    %16 = vector.shape_cast %15 : vector<1x6x128xf32> to vector<6x128xf32>
    %17 = vector.shape_cast %14 : vector<6x128xf32> to vector<1x6x128xf32>
    tpu.vector_store %arg7[%c0_12, %c0_13, %c0_14], %17 {strides = array<i32>} : memref<1x6x128xf32, #tpu.memory_space<vmem>>, vector<1x6x128xf32>,
    return
  }
  func.func @transform_0(%arg0: i32, %arg1: i32) -> (i32, i32, i32) {
    %c0_i32 = arith.constant 0 : i32
    %c0_i32_0 = arith.constant 0 : i32
    return %arg0, %arg1, %c0_i32 : i32, i32, i32
  }
  func.func @transform_1(%arg0: i32, %arg1: i32) -> (i32, i32) {
    %c0_i32 = arith.constant 0 : i32
    %c0_i32_0 = arith.constant 0 : i32
    %c0_i32_1 = arith.constant 0 : i32
    return %c0_i32, %c0_i32_0 : i32, i32
  }
  func.func @transform_2(%arg0: i32, %arg1: i32) -> (i32, i32) {
    %c0_i32 = arith.constant 0 : i32
    %c0_i32_0 = arith.constant 0 : i32
    %c0_i32_1 = arith.constant 0 : i32
    return %c0_i32, %c0_i32_0 : i32, i32
  }
  func.func @transform_3(%arg0: i32, %arg1: i32) -> (i32, i32) {
    %c0_i32 = arith.constant 0 : i32
    %c0_i32_0 = arith.constant 0 : i32
    %c0_i32_1 = arith.constant 0 : i32
    return %c0_i32, %c0_i32_0 : i32, i32
  }
  func.func @transform_4(%arg0: i32, %arg1: i32) -> (i32, i32) {
    %c0_i32 = arith.constant 0 : i32
    %c0_i32_0 = arith.constant 0 : i32
    %c0_i32_1 = arith.constant 0 : i32
    return %c0_i32, %c0_i32_0 : i32, i32
  }
  func.func @transform_5(%arg0: i32, %arg1: i32) -> (i32, i32, i32) {
    %c0_i32 = arith.constant 0 : i32
    %c0_i32_0 = arith.constant 0 : i32
    return %arg0, %arg1, %c0_i32 : i32, i32, i32
  }
}

</mosaic_0001>

<llo_original>
// kernel: tpu_custom_call.1
$region0: #{tpu_custom_call.1}
  #allocation0 [shape = 'u32[]', space=smem, size = 0x4, offset = 0x4, fixed_abs, tag = 'smem constant byte address 0x4 - core index']
  #allocation1 [shape = 'u32[144,128]{1,0:T(1,128)}', space=vmem, size = 0x12000, scoped, tag = 'internal scratch']
  %s0 = inlined_call_operand.vmem [shape: bf16[2,6,32], index: 0, kind: input, shape index: {}]
  %s1 = inlined_call_operand.vmem [shape: bf16[32,128], index: 1, kind: input, shape index: {}]
  %s2 = inlined_call_operand.vmem [shape: f32[1,128], index: 2, kind: input, shape index: {}]
  %s3 = inlined_call_operand.hbm [shape: bf16[128,128], index: 3, kind: input, shape index: {}]
  %s4 = inlined_call_operand.vmem [shape: f32[1,128], index: 4, kind: input, shape index: {}]
  %s5 = inlined_call_operand.vmem [shape: f32[2,6,128], index: 5, kind: output, shape index: {}]
  %s6 = sld [smem:[#allocation0]]
  $region57: #{tpu_custom_call.1} parent=0
    _
  %s8 = ssub.s32 1, %s6
  %s9 = scalar_select 0, %s8, %s6
  $region1: #{tpu_custom_call.1} parent=0
    #allocation2 [shape = 'u8[32768]{0}', space=vmem, size = 0x8000, scoped, tag = 'input window, operand 3, single buffered']
    #allocation3 [shape = 's32[2]{0}', space=sflag, size = 0x8, scoped, tag = 'scoped memory for tpu_custom_call.1']
    %10 = vsyncpa [#allocation3], 0
    loop: start=0, step=1, limit=4
    $region2: #{tpu_custom_call.1} parent=1 // loop_pre_header
      _
    $region3: #{tpu_custom_call.1} parent=1 // loop_header
      %s12 = sphi 0, %s16
      %p13 = scmp.ge.s32.totalorder %s12, 4
      %s19 = sphi 0, %s31
      %s20 = sphi 0, %s27
      %s21 = sphi 0, %s19
      %s22 = sphi 0, %s20
      %s23 = sphi 0, %s21
      %s24 = sphi 0, %s22
      %s36 = sphi 0, %s38
      %s39 = sphi 0, %s36
      %s40 = sphi 0, %s39
      %s56 = sphi 0, %s40
      %s60 = sphi 0, %s60
      %s62 = sphi 0, %s60
      %s63 = sphi 0, %s62
      %s77 = sphi 0, %s63
      %s81 = sphi 0, %s81
      %s83 = sphi 0, %s81
      %s84 = sphi 0, %s83
      %s98 = sphi 0, %s84
      %s102 = sphi 0, %s102
      %s104 = sphi 0, %s102
      %s105 = sphi 0, %s104
      %s119 = sphi 0, %s105
      %s123 = sphi 0, %s123
      %s125 = sphi 0, %s123
      %s126 = sphi 0, %s125
      %s140 = sphi 0, %s126
      %s148 = sphi 0, %s150
      %s151 = sphi 0, %s148
      %s152 = sphi 0, %s151
      %s168 = sphi 0, %s152
    $region4: #{tpu_custom_call.1} parent=1 // loop_header_branch
      %15 = sbr.rel (%p13) target = $region8
    $region5: #{tpu_custom_call.1} parent=1 // loop_body
      %s17 = ssub.s32 %s12, 1
      %s18 = ssub.s32 %s12, 2
      %s25 = sadd.s32 1, %s20
      %p26 = scmp.ge.s32.totalorder %s25, 1
      %s27 = scalar_select %p26, 0, %s25
      %s28 = sadd.s32 1, %s19
      %s29 = scalar_select %p26, %s28, %s19
      %p30 = scmp.ge.s32.totalorder %s29, 2
      %s31 = scalar_select %p30, 0, %s29
      %s32 = ssub.s32 %s19, %s31
      %s33 = ssub.s32 %s20, %s27
      %s34 = sor.u32 %s32, %s33
      %p35 = scmp.eq.s32.totalorder %s34, 0
      %s37 = sadd.s32 %s36, 1
      %s38 = scalar_select %p35, %s36, %s37
      %p41 = pneg %p35
      %p42 = scmp.eq.s32.totalorder %s12, 1
      %p43 = por %p41, %p42
      %p44 = scmp.ne.s32.totalorder %s36, %s39
      %p45 = scmp.eq.s32.totalorder %s12, 0
      %p46 = por %p44, %p45
      %p47 = scmp.ne.s32.totalorder %s36, %s39
      %p48 = scmp.eq.s32.totalorder %s17, 1
      %p49 = por %p47, %p48
      %p50 = scmp.ne.s32.totalorder %s39, %s40
      %p51 = scmp.eq.s32.totalorder %s17, 0
      %p52 = por %p50, %p51
      %p53 = scmp.ne.s32.totalorder %s39, %s40
      %p54 = scmp.eq.s32.totalorder %s18, 1
      %p55 = por %p53, %p54
      %p57 = scmp.ne.s32.totalorder %s40, %s56
      %p58 = scmp.eq.s32.totalorder %s18, 0
      %p59 = por %p57, %p58
      %s61 = sadd.s32 %s60, 1
      %p64 = scmp.eq.s32.totalorder %s12, 1
      %p65 = scmp.ne.s32.totalorder %s60, %s62
      %p66 = scmp.eq.s32.totalorder %s12, 0
      %p67 = por %p65, %p66
      %p68 = scmp.ne.s32.totalorder %s60, %s62
      %p69 = scmp.eq.s32.totalorder %s17, 1
      %p70 = por %p68, %p69
      %p71 = scmp.ne.s32.totalorder %s62, %s63
      %p72 = scmp.eq.s32.totalorder %s17, 0
      %p73 = por %p71, %p72
      %p74 = scmp.ne.s32.totalorder %s62, %s63
      %p75 = scmp.eq.s32.totalorder %s18, 1
      %p76 = por %p74, %p75
      %p78 = scmp.ne.s32.totalorder %s63, %s77
      %p79 = scmp.eq.s32.totalorder %s18, 0
      %p80 = por %p78, %p79
      %s82 = sadd.s32 %s81, 1
      %p85 = scmp.eq.s32.totalorder %s12, 1
      %p86 = scmp.ne.s32.totalorder %s81, %s83
      %p87 = scmp.eq.s32.totalorder %s12, 0
      %p88 = por %p86, %p87
      %p89 = scmp.ne.s32.totalorder %s81, %s83
      %p90 = scmp.eq.s32.totalorder %s17, 1
      %p91 = por %p89, %p90
      %p92 = scmp.ne.s32.totalorder %s83, %s84
      %p93 = scmp.eq.s32.totalorder %s17, 0
      %p94 = por %p92, %p93
      %p95 = scmp.ne.s32.totalorder %s83, %s84
      %p96 = scmp.eq.s32.totalorder %s18, 1
      %p97 = por %p95, %p96
      %p99 = scmp.ne.s32.totalorder %s84, %s98
      %p100 = scmp.eq.s32.totalorder %s18, 0
      %p101 = por %p99, %p100
      %s103 = sadd.s32 %s102, 1
      %p106 = scmp.eq.s32.totalorder %s12, 1
      %p107 = scmp.ne.s32.totalorder %s102, %s104
      %p108 = scmp.eq.s32.totalorder %s12, 0
      %p109 = por %p107, %p108
      %p110 = scmp.ne.s32.totalorder %s102, %s104
      %p111 = scmp.eq.s32.totalorder %s17, 1
      %p112 = por %p110, %p111
      %p113 = scmp.ne.s32.totalorder %s104, %s105
      %p114 = scmp.eq.s32.totalorder %s17, 0
      %p115 = por %p113, %p114
      %p116 = scmp.ne.s32.totalorder %s104, %s105
      %p117 = scmp.eq.s32.totalorder %s18, 1
      %p118 = por %p116, %p117
      %p120 = scmp.ne.s32.totalorder %s105, %s119
      %p121 = scmp.eq.s32.totalorder %s18, 0
      %p122 = por %p120, %p121
      %s124 = sadd.s32 %s123, 1
      %p127 = scmp.eq.s32.totalorder %s12, 1
      %p128 = scmp.ne.s32.totalorder %s123, %s125
      %p129 = scmp.eq.s32.totalorder %s12, 0
      %p130 = por %p128, %p129
      %p131 = scmp.ne.s32.totalorder %s123, %s125
      %p132 = scmp.eq.s32.totalorder %s17, 1
      %p133 = por %p131, %p132
      %p134 = scmp.ne.s32.totalorder %s125, %s126
      %p135 = scmp.eq.s32.totalorder %s17, 0
      %p136 = por %p134, %p135
      %p137 = scmp.ne.s32.totalorder %s125, %s126
      %p138 = scmp.eq.s32.totalorder %s18, 1
      %p139 = por %p137, %p138
      %p141 = scmp.ne.s32.totalorder %s126, %s140
      %p142 = scmp.eq.s32.totalorder %s18, 0
      %p143 = por %p141, %p142
      %s144 = ssub.s32 %s19, %s31
      %s145 = ssub.s32 %s20, %s27
      %s146 = sor.u32 %s144, %s145
      %p147 = scmp.eq.s32.totalorder %s146, 0
      %s149 = sadd.s32 %s148, 1
      %s150 = scalar_select %p147, %s148, %s149
      %p153 = pneg %p147
      %p154 = scmp.eq.s32.totalorder %s12, 1
      %p155 = por %p153, %p154
      %p156 = scmp.ne.s32.totalorder %s148, %s151
      %p157 = scmp.eq.s32.totalorder %s12, 0
      %p158 = por %p156, %p157
      %p159 = scmp.ne.s32.totalorder %s148, %s151
      %p160 = scmp.eq.s32.totalorder %s17, 1
      %p161 = por %p159, %p160
      %p162 = scmp.ne.s32.totalorder %s151, %s152
      %p163 = scmp.eq.s32.totalorder %s17, 0
      %p164 = por %p162, %p163
      %p165 = scmp.ne.s32.totalorder %s151, %s152
      %p166 = scmp.eq.s32.totalorder %s18, 1
      %p167 = por %p165, %p166
      %p169 = scmp.ne.s32.totalorder %s152, %s168
      %p170 = scmp.eq.s32.totalorder %s18, 0
      %p171 = por %p169, %p170
      %p172 = scmp.le.s32.totalorder 1, %s12
      %p173 = scmp.lt.s32.totalorder %s12, 3
      %p174 = pnand %p172, %p173
      %p175 = pneg %p174
      // Predicated region
      $region9: #{tpu_custom_call.1} parent=5 // pred_check
        _
      $region10: #{tpu_custom_call.1} parent=5 // pred_check_branch
        %177 = sbr.rel (%p174) target = $region12
      $region11: #{tpu_custom_call.1} parent=5 // pred_region
        %s178 = ssub.s32 %s12, 1
        // Predicated region
        $region13: #{tpu_custom_call.1} parent=11 // pred_check
          %p179 = pneg %p73
        $region14: #{tpu_custom_call.1} parent=11 // pred_check_branch
          %181 = sbr.rel (%p179) target = $region16
        $region15: #{tpu_custom_call.1} parent=11 // pred_region
          _
        $region16: #{tpu_custom_call.1} parent=11 // pred_fallthru
          _
        // Predicated region
        $region17: #{tpu_custom_call.1} parent=11 // pred_check
          %p182 = pneg %p94
        $region18: #{tpu_custom_call.1} parent=11 // pred_check_branch
          %184 = sbr.rel (%p182) target = $region20
        $region19: #{tpu_custom_call.1} parent=11 // pred_region
          _
        $region20: #{tpu_custom_call.1} parent=11 // pred_fallthru
          _
        // Predicated region
        $region21: #{tpu_custom_call.1} parent=11 // pred_check
          %p185 = pneg %p115
        $region22: #{tpu_custom_call.1} parent=11 // pred_check_branch
          %187 = sbr.rel (%p185) target = $region24
        $region23: #{tpu_custom_call.1} parent=11 // pred_region
          %s189 = ssub.s32 1024, 1024
          %190 = vsyncadd [#allocation3], %s189
          %s191 = sshll.u32 [#allocation2], 4
          %s192 = int_to_ptr.vmem [resolvable:$true] %s191
          %197 = dma.hbm_to_vmem [thread:$0]  %s3, 1024, %s192, [#allocation3], 64, 64, 4
        $region24: #{tpu_custom_call.1} parent=11 // pred_fallthru
          _
        // Predicated region
        $region25: #{tpu_custom_call.1} parent=11 // pred_check
          %p198 = pneg %p136
        $region26: #{tpu_custom_call.1} parent=11 // pred_check_branch
          %200 = sbr.rel (%p198) target = $region28
        $region27: #{tpu_custom_call.1} parent=11 // pred_region
          _
        $region28: #{tpu_custom_call.1} parent=11 // pred_fallthru
          _
      $region12: #{tpu_custom_call.1} parent=5 // pred_fallthru
        _
      %p201 = scmp.lt.s32.totalorder %s12, 2
      // Predicated region
      $region29: #{tpu_custom_call.1} parent=5 // pred_check
        %p202 = pneg %p201
      $region30: #{tpu_custom_call.1} parent=5 // pred_check_branch
        %204 = sbr.rel (%p202) target = $region32
      $region31: #{tpu_custom_call.1} parent=5 // pred_region
        // Predicated region
        $region33: #{tpu_custom_call.1} parent=31 // pred_check
          %p205 = pneg %p46
        $region34: #{tpu_custom_call.1} parent=31 // pred_check_branch
          %207 = sbr.rel (%p205) target = $region36
        $region35: #{tpu_custom_call.1} parent=31 // pred_region
          %p208 = scmp.lt.s32.totalorder %s19, 1
          %s209 = scalar_select %p208, %s19, 1
          %p210 = scmp.lt.s32.totalorder %s20, 0
          %s211 = scalar_select %p210, %s20, 0
          %s212 = sadd.s32 %s211, %s209
          %s213 = smul.addr %s212, 4
          %s214 = scalar_lea.vmem %s0, %s213
        $region36: #{tpu_custom_call.1} parent=31 // pred_fallthru
          _
      $region32: #{tpu_custom_call.1} parent=5 // pred_fallthru
        _
      %p215 = scmp.le.s32.totalorder 1, %s12
      %p216 = scmp.lt.s32.totalorder %s12, 3
      %p217 = pnand %p215, %p216
      %p218 = pneg %p217
      // Predicated region
      $region37: #{tpu_custom_call.1} parent=5 // pred_check
        _
      $region38: #{tpu_custom_call.1} parent=5 // pred_check_branch
        %220 = sbr.rel (%p217) target = $region40
      $region39: #{tpu_custom_call.1} parent=5 // pred_region
        %s221 = ssub.s32 %s12, 1
        // Predicated region
        $region41: #{tpu_custom_call.1} parent=39 // pred_check
          %p222 = pneg %p115
        $region42: #{tpu_custom_call.1} parent=39 // pred_check_branch
          %224 = sbr.rel (%p222) target = $region44
        $region43: #{tpu_custom_call.1} parent=39 // pred_region
          %225 = dma.done [#allocation3], 1024
        $region44: #{tpu_custom_call.1} parent=39 // pred_fallthru
          _
        %p226 = scmp.lt.s32.totalorder %s21, 1
        %s227 = scalar_select %p226, %s21, 1
        %p228 = scmp.lt.s32.totalorder %s22, 0
        %s229 = scalar_select %p228, %s22, 0
        %s230 = sadd.s32 %s229, %s227
        %s231 = smul.addr %s230, 4
        %s232 = scalar_lea.vmem %s0, %s231
        %p233 = pneg %p52
        %p234 = pneg %p49
        %p235 = pneg %p73
        %p236 = pneg %p70
        %p237 = pneg %p94
        %p238 = pneg %p91
        %p239 = pneg %p115
        %p240 = pneg %p112
        %p241 = pneg %p136
        %p242 = pneg %p133
        %p243 = pneg %p164
        %p244 = pneg %p161
        %p245 = scmp.lt.s32.totalorder %s21, 1
        %s246 = scalar_select %p245, %s21, 1
        %p247 = scmp.lt.s32.totalorder %s22, 0
        %s248 = scalar_select %p247, %s22, 0
        %s249 = sadd.s32 %s248, %s246
        %s250 = smul.addr %s249, 8
        %s251 = scalar_lea.vmem %s5, %s250
        %p252 = scmp.lt.s32.totalorder %s21, 1
        %s253 = scalar_select %p252, %s21, 1
        %p254 = scmp.lt.s32.totalorder %s22, 0
        %s255 = scalar_select %p254, %s22, 0
        %s256 = sadd.s32 %s255, %s253
        %s257 = smul.addr %s256, 4
        %s258 = scalar_lea.vmem %s0, %s257
        %p259 = scmp.lt.s32.totalorder %s21, 1
        %s260 = scalar_select %p259, %s21, 1
        %p261 = scmp.lt.s32.totalorder %s22, 0
        %s262 = scalar_select %p261, %s22, 0
        %s263 = sadd.s32 %s262, %s260
        %s264 = smul.addr %s263, 8
        %s265 = scalar_lea.vmem %s5, %s264
        %v267 = vld [vmem:[%s258] sm:$0x7]
        %v268 = vld [vmem:[%s1] sm:$0xf]
        %v269 = vld [vmem:[%s1 + $0x4] sm:$0xf]
        %v270 = vld [vmem:[%s1 + $0x8] sm:$0xf]
        %v271 = vld [vmem:[%s1 + $0xc] sm:$0xf]
        %v272 = vld [vmem:[%s2] sm:$0x1]
        %v274 = vlaneseq
        %v275 = vshrl.u32 %v274, 7
        %v276 = vsub.s32 0, %v275
        %v277 = vrot.slane %v272, %v276
        %v283 = vunpack.c.l.b16 %v268
        %v284 = vunpack.c.l.b16 %v269
        %v285 = vunpack.c.l.b16 %v270
        %v286 = vunpack.c.l.b16 %v271
        %v287 = vpack.c.b16 %v284, %v283
        %v288 = vpack.c.b16 %v286, %v285
        %vm291 = vcmask 261120
        %v293 = vsel %vm291, %v267, 0
        %295 = vmatprep.subr.bf16.mxu0 0
        %296 = vmatpush1.bf16.msra.mxu0 %v287
        %297 = vmatprep.subr.bf16.mxu0 0
        %298 = vmatpush1.bf16.msra.mxu0 %v288
        %299 = vmatprep.subr.bf16.mxu0 0
        %300 = vmatpush1.bf16.msra.mxu0 0
        %301 = vmatprep.subr.bf16.mxu0 0
        %302 = vmatpush1.bf16.msra.mxu0 0
        %303 = vmatprep.subr.bf16.mxu0 0
        %304 = vmatpush1.bf16.msra.mxu0 0
        %305 = vmatprep.subr.bf16.mxu0 0
        %306 = vmatpush1.bf16.msra.mxu0 0
        %307 = vmatprep.subr.bf16.mxu0 0
        %308 = vmatpush1.bf16.msra.mxu0 0
        %309 = vmatprep.subr.bf16.mxu0 0
        %310 = vmatpush1.bf16.msra.mxu0 0
        %311 = vmatprep.subr.bf16.mxu0 0
        %312 = vmatpush1.bf16.msra.mxu0 0
        %313 = vmatprep.subr.bf16.mxu0 0
        %314 = vmatpush1.bf16.msra.mxu0 0
        %315 = vmatprep.subr.bf16.mxu0 0
        %316 = vmatpush1.bf16.msra.mxu0 0
        %317 = vmatprep.subr.bf16.mxu0 0
        %318 = vmatpush1.bf16.msra.mxu0 0
        %319 = vmatprep.subr.bf16.mxu0 0
        %320 = vmatpush1.bf16.msra.mxu0 0
        %321 = vmatprep.subr.bf16.mxu0 0
        %322 = vmatpush1.bf16.msra.mxu0 0
        %323 = vmatprep.subr.bf16.mxu0 0
        %324 = vmatpush1.bf16.msra.mxu0 0
        %325 = vmatprep.subr.bf16.mxu0 0
        %326 = vmatpush1.bf16.msra.mxu0 0
        %327 = vmatprep.mubr.bf16.mxu0 0
        %328 = vmatmul.mubr.bf16.gmra.mrb[0].mxu0 %v293
        %v329 = vpop.f32.mrb[0].mxu0
        %v330 = vadd.f32 %v277, %v329
        %v331 = vpop.f32.mrb[0].mxu0
        %v332 = vpop.f32.mrb[0].mxu0
        %v333 = vpop.f32.mrb[0].mxu0
        %334 = vdwg.mxu0
        %v335 = vmax.f32 %v330, 0.0
        %v336 = vpack.c.bf16 %v335, %v335
        %v337 = vld [vmem:[#allocation2] sm:$0xf]
        %v338 = vld [vmem:[#allocation2 + $0x4] sm:$0xf]
        %v339 = vld [vmem:[#allocation2 + $0x8] sm:$0xf]
        %v340 = vld [vmem:[#allocation2 + $0xc] sm:$0xf]
        %v341 = vld [vmem:[#allocation2 + $0x10] sm:$0xf]
        %v342 = vld [vmem:[#allocation2 + $0x14] sm:$0xf]
        %v343 = vld [vmem:[#allocation2 + $0x18] sm:$0xf]
        %v344 = vld [vmem:[#allocation2 + $0x1c] sm:$0xf]
        %v345 = vld [vmem:[#allocation2 + $0x20] sm:$0xf]
        %v346 = vld [vmem:[#allocation2 + $0x24] sm:$0xf]
        %v347 = vld [vmem:[#allocation2 + $0x28] sm:$0xf]
        %v348 = vld [vmem:[#allocation2 + $0x2c] sm:$0xf]
        %v349 = vld [vmem:[#allocation2 + $0x30] sm:$0xf]
        %v350 = vld [vmem:[#allocation2 + $0x34] sm:$0xf]
        %v351 = vld [vmem:[#allocation2 + $0x38] sm:$0xf]
        %v352 = vld [vmem:[#allocation2 + $0x3c] sm:$0xf]
        %v353 = vld [vmem:[%s4] sm:$0x1]
        %v355 = vlaneseq
        %v356 = vshrl.u32 %v355, 7
        %v357 = vsub.s32 0, %v356
        %v358 = vrot.slane %v353, %v357
        %v376 = vunpack.c.l.b16 %v337
        %v377 = vunpack.c.l.b16 %v338
        %v378 = vunpack.c.l.b16 %v339
        %v379 = vunpack.c.l.b16 %v340
        %v380 = vunpack.c.l.b16 %v341
        %v381 = vunpack.c.l.b16 %v342
        %v382 = vunpack.c.l.b16 %v343
        %v383 = vunpack.c.l.b16 %v344
        %v384 = vunpack.c.l.b16 %v345
        %v385 = vunpack.c.l.b16 %v346
        %v386 = vunpack.c.l.b16 %v347
        %v387 = vunpack.c.l.b16 %v348
        %v388 = vunpack.c.l.b16 %v349
        %v389 = vunpack.c.l.b16 %v350
        %v390 = vunpack.c.l.b16 %v351
        %v391 = vunpack.c.l.b16 %v352
        %v392 = vpack.c.b16 %v377, %v376
        %v393 = vpack.c.b16 %v379, %v378
        %v394 = vpack.c.b16 %v381, %v380
        %v395 = vpack.c.b16 %v383, %v382
        %v396 = vpack.c.b16 %v385, %v384
        %v397 = vpack.c.b16 %v387, %v386
        %v398 = vpack.c.b16 %v389, %v388
        %v399 = vpack.c.b16 %v391, %v390
        %408 = vmatprep.subr.bf16.mxu0 0
        %409 = vmatpush1.bf16.msra.mxu0 %v392
        %410 = vmatprep.subr.bf16.mxu0 0
        %411 = vmatpush1.bf16.msra.mxu0 %v393
        %412 = vmatprep.subr.bf16.mxu0 0
        %413 = vmatpush1.bf16.msra.mxu0 %v394
        %414 = vmatprep.subr.bf16.mxu0 0
        %415 = vmatpush1.bf16.msra.mxu0 %v395
        %416 = vmatprep.subr.bf16.mxu0 0
        %417 = vmatpush1.bf16.msra.mxu0 %v396
        %418 = vmatprep.subr.bf16.mxu0 0
        %419 = vmatpush1.bf16.msra.mxu0 %v397
        %420 = vmatprep.subr.bf16.mxu0 0
        %421 = vmatpush1.bf16.msra.mxu0 %v398
        %422 = vmatprep.subr.bf16.mxu0 0
        %423 = vmatpush1.bf16.msra.mxu0 %v399
        %424 = vmatprep.subr.bf16.mxu0 0
        %425 = vmatpush1.bf16.msra.mxu0 0
        %426 = vmatprep.subr.bf16.mxu0 0
        %427 = vmatpush1.bf16.msra.mxu0 0
        %428 = vmatprep.subr.bf16.mxu0 0
        %429 = vmatpush1.bf16.msra.mxu0 0
        %430 = vmatprep.subr.bf16.mxu0 0
        %431 = vmatpush1.bf16.msra.mxu0 0
        %432 = vmatprep.subr.bf16.mxu0 0
        %433 = vmatpush1.bf16.msra.mxu0 0
        %434 = vmatprep.subr.bf16.mxu0 0
        %435 = vmatpush1.bf16.msra.mxu0 0
        %436 = vmatprep.subr.bf16.mxu0 0
        %437 = vmatpush1.bf16.msra.mxu0 0
        %438 = vmatprep.subr.bf16.mxu0 0
        %439 = vmatpush1.bf16.msra.mxu0 0
        %440 = vmatprep.mubr.bf16.mxu0 0
        %441 = vmatmul.mubr.bf16.gmra.mrb[0].mxu0 %v336
        %v442 = vpop.f32.mrb[0].mxu0
        %v443 = vadd.f32 %v358, %v442
        %v444 = vpop.f32.mrb[0].mxu0
        %v445 = vpop.f32.mrb[0].mxu0
        %v446 = vpop.f32.mrb[0].mxu0
        %447 = vdwg.mxu0
        %448 = vst [vmem:[%s265] sm:$0x3f] %v443
        %p449 = scmp.lt.s32.totalorder %s21, 1
        %s450 = scalar_select %p449, %s21, 1
        %p451 = scmp.lt.s32.totalorder %s22, 0
        %s452 = scalar_select %p451, %s22, 0
        %s453 = sadd.s32 %s452, %s450
        %s454 = smul.addr %s453, 8
        %s455 = scalar_lea.vmem %s5, %s454
        // Predicated region
        $region45: #{tpu_custom_call.1} parent=39 // pred_check
          %p456 = pneg %p161
        $region46: #{tpu_custom_call.1} parent=39 // pred_check_branch
          %458 = sbr.rel (%p456) target = $region48
        $region47: #{tpu_custom_call.1} parent=39 // pred_region
          _
        $region48: #{tpu_custom_call.1} parent=39 // pred_fallthru
          _
      $region40: #{tpu_custom_call.1} parent=5 // pred_fallthru
        _
      %p459 = scmp.le.s32.totalorder 2, %s12
      // Predicated region
      $region49: #{tpu_custom_call.1} parent=5 // pred_check
        %p460 = pneg %p459
      $region50: #{tpu_custom_call.1} parent=5 // pred_check_branch
        %462 = sbr.rel (%p460) target = $region52
      $region51: #{tpu_custom_call.1} parent=5 // pred_region
        %s463 = ssub.s32 %s12, 2
        // Predicated region
        $region53: #{tpu_custom_call.1} parent=51 // pred_check
          %p464 = pneg %p167
        $region54: #{tpu_custom_call.1} parent=51 // pred_check_branch
          %466 = sbr.rel (%p464) target = $region56
        $region55: #{tpu_custom_call.1} parent=51 // pred_region
          %p467 = scmp.lt.s32.totalorder %s23, 1
          %s468 = scalar_select %p467, %s23, 1
          %p469 = scmp.lt.s32.totalorder %s24, 0
          %s470 = scalar_select %p469, %s24, 0
          %s471 = sadd.s32 %s470, %s468
          %s472 = smul.addr %s471, 8
          %s473 = scalar_lea.vmem %s5, %s472
        $region56: #{tpu_custom_call.1} parent=51 // pred_fallthru
          _
      $region52: #{tpu_custom_call.1} parent=5 // pred_fallthru
        _
    $region6: #{tpu_custom_call.1} parent=1 // loop_footer
      %s16 = sadd.s32 1, %s12
    $region7: #{tpu_custom_call.1} parent=1 // loop_footer_branch
      %11 = sbr.rel target = $region3
    $region8: #{tpu_custom_call.1} parent=1 // loop_exit
      _
    %474 = vsyncpa [#allocation3], 1
    %s475 = scalar_lea.sflag [#allocation3], 1
    %476 = vsyncpa %s475, 1

</llo_original>
